<compile_context>
chip_gen: v7x
topology: tpu7x:2x2x1
jax: 0.10.0
libtpu: 0.0.40
codegen_flags: <defaults>
</compile_context>

<pallas_src>
import functools

import jax
import jax.numpy as jnp
from jax.experimental import pallas as pl
from jax.experimental.pallas import tpu as pltpu


def mdn_kernel(xT_ref, w0_ref, b0_ref, wh_ref, bh_ref, wheads_ref, bheads_ref,
               out_ref, *, n_extra_layers, n_gaussians):
    # ---- Trunk: h = tanh(W @ h + b), batch on lanes -------------------------
    h = jnp.tanh(
        jnp.dot(w0_ref[...], xT_ref[...], preferred_element_type=jnp.float32)
        + b0_ref[...])

    for i in range(n_extra_layers):  # static unroll over the hidden layers
        # bh_ref[i] is (n_hidden, 1): the add is a free lane-broadcast on the
        # VPU -- do NOT hoist/materialize an (L-1, n_hidden, tb) broadcast.
        h = jnp.tanh(
            jnp.dot(wh_ref[i], h, preferred_element_type=jnp.float32)
            + bh_ref[i])

    # ---- Fused heads: rows [0:G)=pi logits, [G:2G)=sigma logits, [2G:3G)=mu -
    heads = (jnp.dot(wheads_ref[...], h, preferred_element_type=jnp.float32)
             + bheads_ref[...])

    G = n_gaussians
    pi_logits = heads[:G, :]
    sig_logits = heads[G:2 * G, :]
    mu = heads[2 * G:, :]

    # Max-stabilized softmax over the gaussian (sublane) axis, per column.
    # exp() only ever sees the pi / sigma rows, so mu rows can't overflow it.
    m = jnp.max(pi_logits, axis=0, keepdims=True)
    e_pi = jnp.exp(pi_logits - m)
    s = jnp.sum(e_pi, axis=0, keepdims=True)
    inv = pl.reciprocal(s, approx=True)      # EUP slot (otherwise idle)
    inv = inv * (2.0 - s * inv)              # one Newton step -> ~f32 exact

    # Three full-lane, sublane-aligned stores (G is a multiple of 8 here).
    out_ref[:G, :] = e_pi * inv
    out_ref[G:2 * G, :] = jnp.exp(sig_logits)
    out_ref[2 * G:, :] = mu


def _default_batch_tile(B):
    """Batch-lane tile.

    Small batches (B <= 2048): a single grid step (tb = B) -- grid-step
    overhead dominates any overlap benefit at these dims. Large batches: the
    largest multiple-of-128 divisor of B up to 8192 rows, preferring an even
    step count so the 'parallel' grid axis splits across both v7x TCs.
    """
    if B <= 2048:
        return B
    cap = min(8192, B)
    cap -= cap % 128
    best = None
    for cand in range(cap, 127, -128):
        if B % cand == 0:
            if best is None:
                best = cand
            if (B // cand) % 2 == 0:
                return cand
    return best if best is not None else B


def mdn_forward_fused(x, params, *, batch_tile=None):
    """Runs the kernel; returns the fused [3G, B] slab (pi | sigma | mu rows).

    Prefer consuming this slab directly (slice inside the downstream op, e.g.
    the MDN NLL) so XLA fuses the slices instead of materializing three extra
    HBM copies of the kernel output.
    """
    B, n_input = x.shape
    n_gaussians = params["wpi"].shape[0]
    n_extra_layers = params["wh"].shape[0]

    tb = batch_tile if batch_tile is not None else _default_batch_tile(B)
    assert B % tb == 0, "batch must be divisible by batch_tile"
    assert tb == B or tb % 128 == 0, "batch_tile must be a multiple of 128"
    grid = (B // tb,)

    # Fuse the three head projections into one [3G, n_hidden] weight / bias.
    wheads = jnp.concatenate(
        [params["wpi"], params["wsig"], params["wmu"]], axis=0)
    bheads = jnp.concatenate(
        [params["bpi"], params["bsig"], params["bmu"]], axis=0)

    xT = x.T  # [n_input, B] -- batch on lanes (trivial B x 4 transpose)

    # Weights/biases: constant block index -> DMA'd once, VMEM-resident across
    # all batch grid steps. Only x^T and the output slab are tiled over lanes.
    full = lambda shape: pl.BlockSpec(shape, lambda i: (0,) * len(shape))
    lane_tiled = lambda rows: pl.BlockSpec((rows, tb), lambda i: (0, i))

    kernel = functools.partial(
        mdn_kernel, n_extra_layers=n_extra_layers, n_gaussians=n_gaussians)

    return pl.pallas_call(
        kernel,
        out_shape=jax.ShapeDtypeStruct((3 * n_gaussians, B), jnp.float32),
        grid_spec=pltpu.PrefetchScalarGridSpec(
            num_scalar_prefetch=0,
            grid=grid,
            in_specs=[
                lane_tiled(n_input),           # x^T        [n_input, tb]
                full(params["w0"].shape),      # w0         [H, n_input]
                full(params["b0"].shape),      # b0         [H, 1]
                full(params["wh"].shape),      # wh stack   [L-1, H, H]
                full(params["bh"].shape),      # bh stack   [L-1, H, 1]
                full(wheads.shape),            # head weights [3G, H]
                full(bheads.shape),            # head biases  [3G, 1]
            ],
            out_specs=lane_tiled(3 * n_gaussians),
        ),
        compiler_params=pltpu.CompilerParams(
            dimension_semantics=("parallel",)),
    )(xT, params["w0"], params["b0"], params["wh"], params["bh"],
      wheads, bheads)


def mdn_forward(x, params, *, batch_tile=None):
    """Module-compatible wrapper: returns (pi, sigma, mu), each [B, n_gaussians].

    Note: the slices/transposes below materialize extra HBM copies of the
    output; for high-throughput paths call mdn_forward_fused() and slice at
    the consumer instead.
    """
    G = params["wpi"].shape[0]
    fused = mdn_forward_fused(x, params, batch_tile=batch_tile)
    pi = fused[:G, :].T
    sigma = fused[G:2 * G, :].T
    mu = fused[2 * G:, :].T
    return pi, sigma, mu


def init_params(key, n_input, n_hidden, n_layers, n_gaussians):
    """Deterministic synthetic parameters in PyTorch nn.Linear layout [out, in],
    with biases as [out, 1] columns (batch-in-lanes friendly)."""
    keys = jax.random.split(key, 10)
    scale = 0.1

    def lin(k, fan_in, fan_out):
        kw, kb = jax.random.split(k)
        w = jax.random.normal(kw, (fan_out, fan_in), jnp.float32) * scale  # [out, in]
        b = jax.random.normal(kb, (fan_out, 1), jnp.float32) * scale       # column bias
        return w, b

    w0, b0 = lin(keys[0], n_input, n_hidden)
    wh_list, bh_list = [], []
    for i in range(n_layers - 1):
        w, b = lin(keys[1 + i], n_hidden, n_hidden)
        wh_list.append(w)
        bh_list.append(b)
    wh = jnp.stack(wh_list, axis=0)                    # (L-1, H, H)
    bh = jnp.stack(bh_list, axis=0)                    # (L-1, H, 1)
    wpi, bpi = lin(keys[7], n_hidden, n_gaussians)
    wsig, bsig = lin(keys[8], n_hidden, n_gaussians)
    wmu, bmu = lin(keys[9], n_hidden, n_gaussians)
    return dict(w0=w0, b0=b0, wh=wh, bh=bh,
                wpi=wpi, bpi=bpi, wsig=wsig, bsig=bsig, wmu=wmu, bmu=bmu)


def mdn_reference(x, params):
    """Pure-JAX reference matching the PyTorch forward."""
    h = jnp.tanh(x @ params["w0"].T + params["b0"][:, 0])
    for i in range(params["wh"].shape[0]):
        h = jnp.tanh(h @ params["wh"][i].T + params["bh"][i, :, 0])
    pi = jax.nn.softmax(h @ params["wpi"].T + params["bpi"][:, 0], axis=-1)
    sigma = jnp.exp(h @ params["wsig"].T + params["bsig"][:, 0])
    mu = h @ params["wmu"].T + params["bmu"][:, 0]
    return pi, sigma, mu


if __name__ == "__main__":
    # Shapes implied by the module: MDN(n_input=4, n_hidden=32, n_layers=3,
    # n_gaussians=8). Batch of 64 is small -> single grid step (tb = B),
    # per the perf review (2 tiny steps would just pay overhead twice).
    n_input, n_hidden, n_layers, n_gaussians = 4, 32, 3, 8
    batch = 64

    key = jax.random.PRNGKey(0)
    kx, kp = jax.random.split(key)
    x = jax.random.normal(kx, (batch, n_input), jnp.float32)
    params = init_params(kp, n_input, n_hidden, n_layers, n_gaussians)

    pi, sigma, mu = mdn_forward(x, params)
    jax.block_until_ready((pi, sigma, mu))

    # Correctness check against the pure-JAX reference.
    pi_r, sigma_r, mu_r = mdn_reference(x, params)
    assert jnp.allclose(pi, pi_r, atol=1e-5, rtol=1e-5)
    assert jnp.allclose(sigma, sigma_r, atol=1e-5, rtol=1e-5)
    assert jnp.allclose(mu, mu_r, atol=1e-5, rtol=1e-5)

    print("KERNEL_OK")
</pallas_src>

<mosaic_0001>
module attributes {stable_mosaic.version = 11 : i64} {
  func.func @mdn_kernel(%arg0: i32, %arg1: memref<4x64xf32, #tpu.memory_space<vmem>>, %arg2: memref<32x4xf32, #tpu.memory_space<vmem>>, %arg3: memref<32x1xf32, #tpu.memory_space<vmem>>, %arg4: memref<2x32x32xf32, #tpu.memory_space<vmem>>, %arg5: memref<2x32x1xf32, #tpu.memory_space<vmem>>, %arg6: memref<24x32xf32, #tpu.memory_space<vmem>>, %arg7: memref<24x1xf32, #tpu.memory_space<vmem>>, %arg8: memref<24x64xf32, #tpu.memory_space<vmem>>) attributes {dimension_semantics = [#tpu.dimension_semantics<parallel>], iteration_bounds = array<i64: 1>, scalar_prefetch = 0 : i64, scratch_operands = 0 : i64, tpu.core_type = #tpu.core_type<tc>, window_params = [{transform_indices = @transform_0, window_bounds = array<i64: 4, 64>}, {pipeline_mode = #tpu.pipeline_mode<synchronous>, transform_indices = @transform_1, window_bounds = array<i64: 32, 4>}, {pipeline_mode = #tpu.pipeline_mode<synchronous>, transform_indices = @transform_2, window_bounds = array<i64: 32, 1>}, {pipeline_mode = #tpu.pipeline_mode<synchronous>, transform_indices = @transform_3, window_bounds = array<i64: 2, 32, 32>}, {pipeline_mode = #tpu.pipeline_mode<synchronous>, transform_indices = @transform_4, window_bounds = array<i64: 2, 32, 1>}, {pipeline_mode = #tpu.pipeline_mode<synchronous>, transform_indices = @transform_5, window_bounds = array<i64: 24, 32>}, {pipeline_mode = #tpu.pipeline_mode<synchronous>, transform_indices = @transform_6, window_bounds = array<i64: 24, 1>}, {transform_indices = @transform_7, window_bounds = array<i64: 24, 64>}]} {
    %c0 = arith.constant 0 : index
    %c0_0 = arith.constant 0 : index
    %0 = vector.load %arg2[%c0, %c0_0] : memref<32x4xf32, #tpu.memory_space<vmem>>, vector<32x4xf32>
    %c0_1 = arith.constant 0 : index
    %c0_2 = arith.constant 0 : index
    %1 = vector.load %arg1[%c0_1, %c0_2] : memref<4x64xf32, #tpu.memory_space<vmem>>, vector<4x64xf32>
    %cst = arith.constant dense<0.000000e+00> : vector<32x64xf32>
    %2 = tpu.matmul %0, %1, %cst {dimension_numbers = #tpu.dot_dimension_numbers<[1], [0], [0], [1], [0, 0, 1, 1], [], []>} : vector<32x4xf32>, vector<4x64xf32>, vector<32x64xf32> -> vector<32x64xf32>
    %c0_3 = arith.constant 0 : index
    %c0_4 = arith.constant 0 : index
    %3 = vector.load %arg3[%c0_3, %c0_4] : memref<32x1xf32, #tpu.memory_space<vmem>>, vector<32x1xf32>
    %4 = vector.broadcast %3 : vector<32x1xf32> to vector<32x64xf32>
    %5 = arith.addf %2, %4 : vector<32x64xf32>
    %6 = math.tanh %5 : vector<32x64xf32>
    %c0_5 = arith.constant 0 : index
    %c0_6 = arith.constant 0 : index
    %c0_7 = arith.constant 0 : index
    %7 = vector.load %arg4[%c0_5, %c0_6, %c0_7] : memref<2x32x32xf32, #tpu.memory_space<vmem>>, vector<1x32x32xf32>
    %8 = vector.shape_cast %7 : vector<1x32x32xf32> to vector<32x32xf32>
    %cst_8 = arith.constant dense<0.000000e+00> : vector<32x64xf32>
    %9 = tpu.matmul %8, %6, %cst_8 {dimension_numbers = #tpu.dot_dimension_numbers<[1], [0], [0], [1], [0, 0, 1, 1], [], []>} : vector<32x32xf32>, vector<32x64xf32>, vector<32x64xf32> -> vector<32x64xf32>
    %c0_9 = arith.constant 0 : index
    %c0_10 = arith.constant 0 : index
    %c0_11 = arith.constant 0 : index
    %10 = vector.load %arg5[%c0_9, %c0_10, %c0_11] : memref<2x32x1xf32, #tpu.memory_space<vmem>>, vector<1x32x1xf32>
    %11 = vector.shape_cast %10 : vector<1x32x1xf32> to vector<32x1xf32>
    %12 = vector.broadcast %11 : vector<32x1xf32> to vector<32x64xf32>
    %13 = arith.addf %9, %12 : vector<32x64xf32>
    %14 = math.tanh %13 : vector<32x64xf32>
    %c1 = arith.constant 1 : index
    %c0_12 = arith.constant 0 : index
    %c0_13 = arith.constant 0 : index
    %15 = vector.load %arg4[%c1, %c0_12, %c0_13] : memref<2x32x32xf32, #tpu.memory_space<vmem>>, vector<1x32x32xf32>
    %16 = vector.shape_cast %15 : vector<1x32x32xf32> to vector<32x32xf32>
    %cst_14 = arith.constant dense<0.000000e+00> : vector<32x64xf32>
    %17 = tpu.matmul %16, %14, %cst_14 {dimension_numbers = #tpu.dot_dimension_numbers<[1], [0], [0], [1], [0, 0, 1, 1], [], []>} : vector<32x32xf32>, vector<32x64xf32>, vector<32x64xf32> -> vector<32x64xf32>
    %c1_15 = arith.constant 1 : index
    %c0_16 = arith.constant 0 : index
    %c0_17 = arith.constant 0 : index
    %18 = vector.load %arg5[%c1_15, %c0_16, %c0_17] : memref<2x32x1xf32, #tpu.memory_space<vmem>>, vector<1x32x1xf32>
    %19 = vector.shape_cast %18 : vector<1x32x1xf32> to vector<32x1xf32>
    %20 = vector.broadcast %19 : vector<32x1xf32> to vector<32x64xf32>
    %21 = arith.addf %17, %20 : vector<32x64xf32>
    %22 = math.tanh %21 : vector<32x64xf32>
    %c0_18 = arith.constant 0 : index
    %c0_19 = arith.constant 0 : index
    %23 = vector.load %arg6[%c0_18, %c0_19] : memref<24x32xf32, #tpu.memory_space<vmem>>, vector<24x32xf32>
    %cst_20 = arith.constant dense<0.000000e+00> : vector<24x64xf32>
    %24 = tpu.matmul %23, %22, %cst_20 {dimension_numbers = #tpu.dot_dimension_numbers<[1], [0], [0], [1], [0, 0, 1, 1], [], []>} : vector<24x32xf32>, vector<32x64xf32>, vector<24x64xf32> -> vector<24x64xf32>
    %c0_21 = arith.constant 0 : index
    %c0_22 = arith.constant 0 : index
    %25 = vector.load %arg7[%c0_21, %c0_22] : memref<24x1xf32, #tpu.memory_space<vmem>>, vector<24x1xf32>
    %26 = vector.broadcast %25 : vector<24x1xf32> to vector<24x64xf32>
    %27 = arith.addf %24, %26 : vector<24x64xf32>
    %28 = vector.extract_strided_slice %27 {offsets = [0, 0], sizes = [8, 64], strides = [1, 1]} : vector<24x64xf32> to vector<8x64xf32>
    %29 = vector.extract_strided_slice %27 {offsets = [8, 0], sizes = [8, 64], strides = [1, 1]} : vector<24x64xf32> to vector<8x64xf32>
    %30 = vector.extract_strided_slice %27 {offsets = [16, 0], sizes = [8, 64], strides = [1, 1]} : vector<24x64xf32> to vector<8x64xf32>
    %cst_23 = arith.constant dense<0xFF800000> : vector<64xf32>
    %31 = vector.multi_reduction <maximumf>, %28, %cst_23 [0] : vector<8x64xf32> to vector<64xf32>
    %32 = vector.shape_cast %31 : vector<64xf32> to vector<1x64xf32>
    %33 = vector.broadcast %32 : vector<1x64xf32> to vector<8x64xf32>
    %34 = arith.subf %28, %33 : vector<8x64xf32>
    %35 = math.exp %34 : vector<8x64xf32>
    %cst_24 = arith.constant dense<0.000000e+00> : vector<64xf32>
    %36 = vector.multi_reduction <add>, %35, %cst_24 [0] : vector<8x64xf32> to vector<64xf32>
    %37 = vector.shape_cast %36 : vector<64xf32> to vector<1x64xf32>
    %38 = tpu.reciprocal %37 {approx = true} : vector<1x64xf32> -> vector<1x64xf32>
    %39 = arith.mulf %37, %38 : vector<1x64xf32>
    %cst_25 = arith.constant 2.000000e+00 : f32
    %40 = vector.broadcast %cst_25 : f32 to vector<1x64xf32>
    %41 = arith.subf %40, %39 : vector<1x64xf32>
    %42 = arith.mulf %38, %41 : vector<1x64xf32>
    %43 = vector.broadcast %42 : vector<1x64xf32> to vector<8x64xf32>
    %44 = arith.mulf %35, %43 : vector<8x64xf32>
    %c0_26 = arith.constant 0 : index
    %c0_27 = arith.constant 0 : index
    %45 = vector.load %arg8[%c0_26, %c0_27] : memref<24x64xf32, #tpu.memory_space<vmem>>, vector<8x64xf32>
    tpu.vector_store %arg8[%c0_26, %c0_27], %44 {strides = array<i32>} : memref<24x64xf32, #tpu.memory_space<vmem>>, vector<8x64xf32>,
    %46 = math.exp %29 : vector<8x64xf32>
    %c8 = arith.constant 8 : index
    %c0_28 = arith.constant 0 : index
    %47 = vector.load %arg8[%c8, %c0_28] : memref<24x64xf32, #tpu.memory_space<vmem>>, vector<8x64xf32>
    tpu.vector_store %arg8[%c8, %c0_28], %46 {strides = array<i32>} : memref<24x64xf32, #tpu.memory_space<vmem>>, vector<8x64xf32>,
    %c16 = arith.constant 16 : index
    %c0_29 = arith.constant 0 : index
    %48 = vector.load %arg8[%c16, %c0_29] : memref<24x64xf32, #tpu.memory_space<vmem>>, vector<8x64xf32>
    tpu.vector_store %arg8[%c16, %c0_29], %30 {strides = array<i32>} : memref<24x64xf32, #tpu.memory_space<vmem>>, vector<8x64xf32>,
    return
  }
  func.func @transform_0(%arg0: i32) -> (i32, i32) {
    %c0_i32 = arith.constant 0 : i32
    %c0_i32_0 = arith.constant 0 : i32
    return %c0_i32, %arg0 : i32, i32
  }
  func.func @transform_1(%arg0: i32) -> (i32, i32) {
    %c0_i32 = arith.constant 0 : i32
    %c0_i32_0 = arith.constant 0 : i32
    %c0_i32_1 = arith.constant 0 : i32
    return %c0_i32, %c0_i32_0 : i32, i32
  }
  func.func @transform_2(%arg0: i32) -> (i32, i32) {
    %c0_i32 = arith.constant 0 : i32
    %c0_i32_0 = arith.constant 0 : i32
    %c0_i32_1 = arith.constant 0 : i32
    return %c0_i32, %c0_i32_0 : i32, i32
  }
  func.func @transform_3(%arg0: i32) -> (i32, i32, i32) {
    %c0_i32 = arith.constant 0 : i32
    %c0_i32_0 = arith.constant 0 : i32
    %c0_i32_1 = arith.constant 0 : i32
    %c0_i32_2 = arith.constant 0 : i32
    return %c0_i32, %c0_i32_0, %c0_i32_1 : i32, i32, i32
  }
  func.func @transform_4(%arg0: i32) -> (i32, i32, i32) {
    %c0_i32 = arith.constant 0 : i32
    %c0_i32_0 = arith.constant 0 : i32
    %c0_i32_1 = arith.constant 0 : i32
    %c0_i32_2 = arith.constant 0 : i32
    return %c0_i32, %c0_i32_0, %c0_i32_1 : i32, i32, i32
  }
  func.func @transform_5(%arg0: i32) -> (i32, i32) {
    %c0_i32 = arith.constant 0 : i32
    %c0_i32_0 = arith.constant 0 : i32
    %c0_i32_1 = arith.constant 0 : i32
    return %c0_i32, %c0_i32_0 : i32, i32
  }
  func.func @transform_6(%arg0: i32) -> (i32, i32) {
    %c0_i32 = arith.constant 0 : i32
    %c0_i32_0 = arith.constant 0 : i32
    %c0_i32_1 = arith.constant 0 : i32
    return %c0_i32, %c0_i32_0 : i32, i32
  }
  func.func @transform_7(%arg0: i32) -> (i32, i32) {
    %c0_i32 = arith.constant 0 : i32
    %c0_i32_0 = arith.constant 0 : i32
    return %c0_i32, %arg0 : i32, i32
  }
}

</mosaic_0001>

<llo_original>
// kernel: tpu_custom_call.1
$region0: #{tpu_custom_call.1}
  #allocation0 [shape = 'u32[]', space=smem, size = 0x4, offset = 0x4, fixed_abs, tag = 'smem constant byte address 0x4 - core index']
  #allocation1 [shape = 'u32[144,128]{1,0:T(1,128)}', space=vmem, size = 0x12000, scoped, tag = 'internal scratch']
  %s0 = inlined_call_operand.vmem [shape: f32[4,64], index: 0, kind: input, shape index: {}]
  %s1 = inlined_call_operand.vmem [shape: f32[32,4], index: 1, kind: input, shape index: {}]
  %s2 = inlined_call_operand.vmem [shape: f32[32,1], index: 2, kind: input, shape index: {}]
  %s3 = inlined_call_operand.vmem [shape: f32[2,32,32], index: 3, kind: input, shape index: {}]
  %s4 = inlined_call_operand.vmem [shape: f32[2,32,1], index: 4, kind: input, shape index: {}]
  %s5 = inlined_call_operand.vmem [shape: f32[24,32], index: 5, kind: input, shape index: {}]
  %s6 = inlined_call_operand.vmem [shape: f32[24,1], index: 6, kind: input, shape index: {}]
  %s7 = inlined_call_operand.hbm [shape: f32[24,64], index: 7, kind: output, shape index: {}]
  %s8 = sld [smem:[#allocation0]]
  $region38: #{tpu_custom_call.1} parent=0
    _
  %s10 = ssub.s32 1, %s8
  %s11 = scalar_select 0, %s10, %s8
  $region1: #{tpu_custom_call.1} parent=0
    #allocation2 [shape = 'u8[12288]{0}', space=vmem, size = 0x3000, scoped, tag = 'output window, operand 0, single buffered']
    #allocation3 [shape = 's32[1]{0}', space=sflag, size = 0x4, scoped, tag = 'scoped memory for tpu_custom_call.1']
    %12 = vsyncpa [#allocation3], 0
    // Predicated region
    $region2: #{tpu_custom_call.1} parent=1 // pred_check
      _
    $region3: #{tpu_custom_call.1} parent=1 // pred_check_branch
      %14 = sbr.rel (0) target = $region5
    $region4: #{tpu_custom_call.1} parent=1 // pred_region
      _
    $region5: #{tpu_custom_call.1} parent=1 // pred_fallthru
      _
    // Predicated region
    $region6: #{tpu_custom_call.1} parent=1 // pred_check
      _
    $region7: #{tpu_custom_call.1} parent=1 // pred_check_branch
      %16 = sbr.rel (0) target = $region9
    $region8: #{tpu_custom_call.1} parent=1 // pred_region
      _
    $region9: #{tpu_custom_call.1} parent=1 // pred_fallthru
      _
    // Predicated region
    $region10: #{tpu_custom_call.1} parent=1 // pred_check
      _
    $region11: #{tpu_custom_call.1} parent=1 // pred_check_branch
      %18 = sbr.rel (0) target = $region13
    $region12: #{tpu_custom_call.1} parent=1 // pred_region
      _
    $region13: #{tpu_custom_call.1} parent=1 // pred_fallthru
      _
    // Predicated region
    $region14: #{tpu_custom_call.1} parent=1 // pred_check
      _
    $region15: #{tpu_custom_call.1} parent=1 // pred_check_branch
      %20 = sbr.rel (0) target = $region17
    $region16: #{tpu_custom_call.1} parent=1 // pred_region
      _
    $region17: #{tpu_custom_call.1} parent=1 // pred_fallthru
      _
    // Predicated region
    $region18: #{tpu_custom_call.1} parent=1 // pred_check
      _
    $region19: #{tpu_custom_call.1} parent=1 // pred_check_branch
      %22 = sbr.rel (0) target = $region21
    $region20: #{tpu_custom_call.1} parent=1 // pred_region
      _
    $region21: #{tpu_custom_call.1} parent=1 // pred_fallthru
      _
    // Predicated region
    $region22: #{tpu_custom_call.1} parent=1 // pred_check
      _
    $region23: #{tpu_custom_call.1} parent=1 // pred_check_branch
      %24 = sbr.rel (0) target = $region25
    $region24: #{tpu_custom_call.1} parent=1 // pred_region
      _
    $region25: #{tpu_custom_call.1} parent=1 // pred_fallthru
      _
    // Predicated region
    $region26: #{tpu_custom_call.1} parent=1 // pred_check
      _
    $region27: #{tpu_custom_call.1} parent=1 // pred_check_branch
      %26 = sbr.rel (0) target = $region29
    $region28: #{tpu_custom_call.1} parent=1 // pred_region
      _
    $region29: #{tpu_custom_call.1} parent=1 // pred_fallthru
      _
    %v27 = vld [vmem:[%s1] sm:$0xff]
    %v28 = vld [vmem:[%s1 + $0x8] sm:$0xff]
    %v29 = vld [vmem:[%s1 + $0x10] sm:$0xff]
    %v30 = vld [vmem:[%s1 + $0x18] sm:$0xff]
    %v31 = vld [vmem:[%s0] sm:$0xf]
    %v32 = vld [vmem:[%s2] sm:$0xff]
    %v33 = vld [vmem:[%s2 + $0x8] sm:$0xff]
    %v34 = vld [vmem:[%s2 + $0x10] sm:$0xff]
    %v35 = vld [vmem:[%s2 + $0x18] sm:$0xff]
    %37 = vset.pattern.permute.xlu0 0
    %38 = vperm.xlu0 %37, %v32
    %v39 = vpop.permute.xlu0 %38
    %42 = vset.pattern.permute.xlu0 0
    %43 = vperm.xlu0 %42, %v33
    %v44 = vpop.permute.xlu0 %43
    %47 = vset.pattern.permute.xlu0 0
    %48 = vperm.xlu0 %47, %v34
    %v49 = vpop.permute.xlu0 %48
    %52 = vset.pattern.permute.xlu0 0
    %53 = vperm.xlu0 %52, %v35
    %v54 = vpop.permute.xlu0 %53
    %vm56 = vcmask 31744
    %v58 = vsel %vm56, %v27, 0
    %v61 = vsel %vm56, %v28, 0
    %v64 = vsel %vm56, %v29, 0
    %v67 = vsel %vm56, %v30, 0
    %vm69 = vcmask 1043456
    %v71 = vsel %vm69, %v31, 0
    %73 = vmatprep.subr.mxu0 0.0
    %74 = vmatpush1.msra.mxu0 %v71
    %75 = vmatprep.subr.mxu0 0.0
    %76 = vmatpush1.msra.mxu0 0.0
    %77 = vmatprep.subr.mxu0 0.0
    %78 = vmatpush1.msra.mxu0 0.0
    %79 = vmatprep.subr.mxu0 0.0
    %80 = vmatpush1.msra.mxu0 0.0
    %81 = vmatprep.subr.mxu0 0.0
    %82 = vmatpush1.msra.mxu0 0.0
    %83 = vmatprep.subr.mxu0 0.0
    %84 = vmatpush1.msra.mxu0 0.0
    %85 = vmatprep.subr.mxu0 0.0
    %86 = vmatpush1.msra.mxu0 0.0
    %87 = vmatprep.subr.mxu0 0.0
    %88 = vmatpush1.msra.mxu0 0.0
    %89 = vmatprep.subr.mxu0 0.0
    %90 = vmatpush1.msra.mxu0 0.0
    %91 = vmatprep.subr.mxu0 0.0
    %92 = vmatpush1.msra.mxu0 0.0
    %93 = vmatprep.subr.mxu0 0.0
    %94 = vmatpush1.msra.mxu0 0.0
    %95 = vmatprep.subr.mxu0 0.0
    %96 = vmatpush1.msra.mxu0 0.0
    %97 = vmatprep.subr.mxu0 0.0
    %98 = vmatpush1.msra.mxu0 0.0
    %99 = vmatprep.subr.mxu0 0.0
    %100 = vmatpush1.msra.mxu0 0.0
    %101 = vmatprep.subr.mxu0 0.0
    %102 = vmatpush1.msra.mxu0 0.0
    %103 = vmatprep.subr.mxu0 0.0
    %104 = vmatpush1.msra.mxu0 0.0
    %105 = vmatprep.subr.mxu0 0.0
    %106 = vmatpush1.msra.mxu0 0.0
    %107 = vmatprep.subr.mxu0 0.0
    %108 = vmatpush1.msra.mxu0 0.0
    %109 = vmatprep.subr.mxu0 0.0
    %110 = vmatpush1.msra.mxu0 0.0
    %111 = vmatprep.subr.mxu0 0.0
    %112 = vmatpush1.msra.mxu0 0.0
    %113 = vmatprep.subr.mxu0 0.0
    %114 = vmatpush1.msra.mxu0 0.0
    %115 = vmatprep.subr.mxu0 0.0
    %116 = vmatpush1.msra.mxu0 0.0
    %117 = vmatprep.subr.mxu0 0.0
    %118 = vmatpush1.msra.mxu0 0.0
    %119 = vmatprep.subr.mxu0 0.0
    %120 = vmatpush1.msra.mxu0 0.0
    %121 = vmatprep.subr.mxu0 0.0
    %122 = vmatpush1.msra.mxu0 0.0
    %123 = vmatprep.subr.mxu0 0.0
    %124 = vmatpush1.msra.mxu0 0.0
    %125 = vmatprep.subr.mxu0 0.0
    %126 = vmatpush1.msra.mxu0 0.0
    %127 = vmatprep.subr.mxu0 0.0
    %128 = vmatpush1.msra.mxu0 0.0
    %129 = vmatprep.subr.mxu0 0.0
    %130 = vmatpush1.msra.mxu0 0.0
    %131 = vmatprep.subr.mxu0 0.0
    %132 = vmatpush1.msra.mxu0 0.0
    %133 = vmatprep.subr.mxu0 0.0
    %134 = vmatpush1.msra.mxu0 0.0
    %135 = vmatprep.subr.mxu0 0.0
    %136 = vmatpush1.msra.mxu0 0.0
    %137 = vmatprep.mubr.f32.mxu0 0.0
    %138 = vmatmul.mubr.f32.gmra.mrb[0].mxu0 %v58
    %v139 = vpop.f32.mrb[0].mxu0
    %v140 = vadd.f32 %v39, %v139
    %v141 = vpop.f32.mrb[0].mxu0
    %142 = vmatprep.mubr.f32.mxu0 0.0
    %143 = vmatmul.mubr.f32.gmra.mrb[0].mxu0 %v61
    %v144 = vpop.f32.mrb[0].mxu0
    %v145 = vadd.f32 %v44, %v144
    %v146 = vpop.f32.mrb[0].mxu0
    %147 = vmatprep.mubr.f32.mxu0 0.0
    %148 = vmatmul.mubr.f32.gmra.mrb[0].mxu0 %v64
    %v149 = vpop.f32.mrb[0].mxu0
    %v150 = vadd.f32 %v49, %v149
    %v151 = vpop.f32.mrb[0].mxu0
    %152 = vmatprep.mubr.f32.mxu0 0.0
    %153 = vmatmul.mubr.f32.gmra.mrb[0].mxu0 %v67
    %v154 = vpop.f32.mrb[0].mxu0
    %v155 = vadd.f32 %v54, %v154
    %v156 = vpop.f32.mrb[0].mxu0
    %157 = vdwg.mxu0
    %v158 = vtanh.pop %v140
    %v159 = vtanh.pop %v145
    %v160 = vtanh.pop %v150
    %v161 = vtanh.pop %v155
    %v162 = vld [vmem:[%s3] sm:$0xff]
    %v163 = vld [vmem:[%s3 + $0x8] sm:$0xff]
    %v164 = vld [vmem:[%s3 + $0x10] sm:$0xff]
    %v165 = vld [vmem:[%s3 + $0x18] sm:$0xff]
    %v166 = vld [vmem:[%s4] sm:$0xff]
    %v167 = vld [vmem:[%s4 + $0x8] sm:$0xff]
    %v168 = vld [vmem:[%s4 + $0x10] sm:$0xff]
    %v169 = vld [vmem:[%s4 + $0x18] sm:$0xff]
    %171 = vset.pattern.permute.xlu0 0
    %172 = vperm.xlu0 %171, %v166
    %v173 = vpop.permute.xlu0 %172
    %176 = vset.pattern.permute.xlu0 0
    %177 = vperm.xlu0 %176, %v167
    %v178 = vpop.permute.xlu0 %177
    %181 = vset.pattern.permute.xlu0 0
    %182 = vperm.xlu0 %181, %v168
    %v183 = vpop.permute.xlu0 %182
    %186 = vset.pattern.permute.xlu0 0
    %187 = vperm.xlu0 %186, %v169
    %v188 = vpop.permute.xlu0 %187
    %vm190 = vcmask 261120
    %v192 = vsel %vm190, %v162, 0
    %v195 = vsel %vm190, %v163, 0
    %v198 = vsel %vm190, %v164, 0
    %v201 = vsel %vm190, %v165, 0
    %203 = vmatprep.subr.mxu0 0.0
    %204 = vmatpush1.msra.mxu0 %v158
    %205 = vmatprep.subr.mxu0 0.0
    %206 = vmatpush1.msra.mxu0 %v159
    %207 = vmatprep.subr.mxu0 0.0
    %208 = vmatpush1.msra.mxu0 %v160
    %209 = vmatprep.subr.mxu0 0.0
    %210 = vmatpush1.msra.mxu0 %v161
    %211 = vmatprep.subr.mxu0 0.0
    %212 = vmatpush1.msra.mxu0 0.0
    %213 = vmatprep.subr.mxu0 0.0
    %214 = vmatpush1.msra.mxu0 0.0
    %215 = vmatprep.subr.mxu0 0.0
    %216 = vmatpush1.msra.mxu0 0.0
    %217 = vmatprep.subr.mxu0 0.0
    %218 = vmatpush1.msra.mxu0 0.0
    %219 = vmatprep.subr.mxu0 0.0
    %220 = vmatpush1.msra.mxu0 0.0
    %221 = vmatprep.subr.mxu0 0.0
    %222 = vmatpush1.msra.mxu0 0.0
    %223 = vmatprep.subr.mxu0 0.0
    %224 = vmatpush1.msra.mxu0 0.0
    %225 = vmatprep.subr.mxu0 0.0
    %226 = vmatpush1.msra.mxu0 0.0
    %227 = vmatprep.subr.mxu0 0.0
    %228 = vmatpush1.msra.mxu0 0.0
    %229 = vmatprep.subr.mxu0 0.0
    %230 = vmatpush1.msra.mxu0 0.0
    %231 = vmatprep.subr.mxu0 0.0
    %232 = vmatpush1.msra.mxu0 0.0
    %233 = vmatprep.subr.mxu0 0.0
    %234 = vmatpush1.msra.mxu0 0.0
    %235 = vmatprep.subr.mxu0 0.0
    %236 = vmatpush1.msra.mxu0 0.0
    %237 = vmatprep.subr.mxu0 0.0
    %238 = vmatpush1.msra.mxu0 0.0
    %239 = vmatprep.subr.mxu0 0.0
    %240 = vmatpush1.msra.mxu0 0.0
    %241 = vmatprep.subr.mxu0 0.0
    %242 = vmatpush1.msra.mxu0 0.0
    %243 = vmatprep.subr.mxu0 0.0
    %244 = vmatpush1.msra.mxu0 0.0
    %245 = vmatprep.subr.mxu0 0.0
    %246 = vmatpush1.msra.mxu0 0.0
    %247 = vmatprep.subr.mxu0 0.0
    %248 = vmatpush1.msra.mxu0 0.0
    %249 = vmatprep.subr.mxu0 0.0
    %250 = vmatpush1.msra.mxu0 0.0
    %251 = vmatprep.subr.mxu0 0.0
    %252 = vmatpush1.msra.mxu0 0.0
    %253 = vmatprep.subr.mxu0 0.0
    %254 = vmatpush1.msra.mxu0 0.0
    %255 = vmatprep.subr.mxu0 0.0
    %256 = vmatpush1.msra.mxu0 0.0
    %257 = vmatprep.subr.mxu0 0.0
    %258 = vmatpush1.msra.mxu0 0.0
    %259 = vmatprep.subr.mxu0 0.0
    %260 = vmatpush1.msra.mxu0 0.0
    %261 = vmatprep.subr.mxu0 0.0
    %262 = vmatpush1.msra.mxu0 0.0
    %263 = vmatprep.subr.mxu0 0.0
    %264 = vmatpush1.msra.mxu0 0.0
    %265 = vmatprep.subr.mxu0 0.0
    %266 = vmatpush1.msra.mxu0 0.0
    %267 = vmatprep.mubr.f32.mxu0 0.0
    %268 = vmatmul.mubr.f32.gmra.mrb[0].mxu0 %v192
    %v269 = vpop.f32.mrb[0].mxu0
    %v270 = vadd.f32 %v173, %v269
    %v271 = vpop.f32.mrb[0].mxu0
    %272 = vmatprep.mubr.f32.mxu0 0.0
    %273 = vmatmul.mubr.f32.gmra.mrb[0].mxu0 %v195
    %v274 = vpop.f32.mrb[0].mxu0
    %v275 = vadd.f32 %v178, %v274
    %v276 = vpop.f32.mrb[0].mxu0
    %277 = vmatprep.mubr.f32.mxu0 0.0
    %278 = vmatmul.mubr.f32.gmra.mrb[0].mxu0 %v198
    %v279 = vpop.f32.mrb[0].mxu0
    %v280 = vadd.f32 %v183, %v279
    %v281 = vpop.f32.mrb[0].mxu0
    %282 = vmatprep.mubr.f32.mxu0 0.0
    %283 = vmatmul.mubr.f32.gmra.mrb[0].mxu0 %v201
    %v284 = vpop.f32.mrb[0].mxu0
    %v285 = vadd.f32 %v188, %v284
    %v286 = vpop.f32.mrb[0].mxu0
    %287 = vdwg.mxu0
    %v288 = vtanh.pop %v270
    %v289 = vtanh.pop %v275
    %v290 = vtanh.pop %v280
    %v291 = vtanh.pop %v285
    %s292 = scalar_lea.vmem %s3, 32
    %v293 = vld [vmem:[%s292] sm:$0xff]
    %v294 = vld [vmem:[%s292 + $0x8] sm:$0xff]
    %v295 = vld [vmem:[%s292 + $0x10] sm:$0xff]
    %v296 = vld [vmem:[%s292 + $0x18] sm:$0xff]
    %s297 = scalar_lea.vmem %s4, 32
    %v298 = vld [vmem:[%s297] sm:$0xff]
    %v299 = vld [vmem:[%s297 + $0x8] sm:$0xff]
    %v300 = vld [vmem:[%s297 + $0x10] sm:$0xff]
    %v301 = vld [vmem:[%s297 + $0x18] sm:$0xff]
    %303 = vset.pattern.permute.xlu0 0
    %304 = vperm.xlu0 %303, %v298
    %v305 = vpop.permute.xlu0 %304
    %308 = vset.pattern.permute.xlu0 0
    %309 = vperm.xlu0 %308, %v299
    %v310 = vpop.permute.xlu0 %309
    %313 = vset.pattern.permute.xlu0 0
    %314 = vperm.xlu0 %313, %v300
    %v315 = vpop.permute.xlu0 %314
    %318 = vset.pattern.permute.xlu0 0
    %319 = vperm.xlu0 %318, %v301
    %v320 = vpop.permute.xlu0 %319
    %v323 = vsel %vm190, %v293, 0
    %v326 = vsel %vm190, %v294, 0
    %v329 = vsel %vm190, %v295, 0
    %v332 = vsel %vm190, %v296, 0
    %334 = vmatprep.subr.mxu0 0.0
    %335 = vmatpush1.msra.mxu0 %v288
    %336 = vmatprep.subr.mxu0 0.0
    %337 = vmatpush1.msra.mxu0 %v289
    %338 = vmatprep.subr.mxu0 0.0
    %339 = vmatpush1.msra.mxu0 %v290
    %340 = vmatprep.subr.mxu0 0.0
    %341 = vmatpush1.msra.mxu0 %v291
    %342 = vmatprep.subr.mxu0 0.0
    %343 = vmatpush1.msra.mxu0 0.0
    %344 = vmatprep.subr.mxu0 0.0
    %345 = vmatpush1.msra.mxu0 0.0
    %346 = vmatprep.subr.mxu0 0.0
    %347 = vmatpush1.msra.mxu0 0.0
    %348 = vmatprep.subr.mxu0 0.0
    %349 = vmatpush1.msra.mxu0 0.0
    %350 = vmatprep.subr.mxu0 0.0
    %351 = vmatpush1.msra.mxu0 0.0
    %352 = vmatprep.subr.mxu0 0.0
    %353 = vmatpush1.msra.mxu0 0.0
    %354 = vmatprep.subr.mxu0 0.0
    %355 = vmatpush1.msra.mxu0 0.0
    %356 = vmatprep.subr.mxu0 0.0
    %357 = vmatpush1.msra.mxu0 0.0
    %358 = vmatprep.subr.mxu0 0.0
    %359 = vmatpush1.msra.mxu0 0.0
    %360 = vmatprep.subr.mxu0 0.0
    %361 = vmatpush1.msra.mxu0 0.0
    %362 = vmatprep.subr.mxu0 0.0
    %363 = vmatpush1.msra.mxu0 0.0
    %364 = vmatprep.subr.mxu0 0.0
    %365 = vmatpush1.msra.mxu0 0.0
    %366 = vmatprep.subr.mxu0 0.0
    %367 = vmatpush1.msra.mxu0 0.0
    %368 = vmatprep.subr.mxu0 0.0
    %369 = vmatpush1.msra.mxu0 0.0
    %370 = vmatprep.subr.mxu0 0.0
    %371 = vmatpush1.msra.mxu0 0.0
    %372 = vmatprep.subr.mxu0 0.0
    %373 = vmatpush1.msra.mxu0 0.0
    %374 = vmatprep.subr.mxu0 0.0
    %375 = vmatpush1.msra.mxu0 0.0
    %376 = vmatprep.subr.mxu0 0.0
    %377 = vmatpush1.msra.mxu0 0.0
    %378 = vmatprep.subr.mxu0 0.0
    %379 = vmatpush1.msra.mxu0 0.0
    %380 = vmatprep.subr.mxu0 0.0
    %381 = vmatpush1.msra.mxu0 0.0
    %382 = vmatprep.subr.mxu0 0.0
    %383 = vmatpush1.msra.mxu0 0.0
    %384 = vmatprep.subr.mxu0 0.0
    %385 = vmatpush1.msra.mxu0 0.0
    %386 = vmatprep.subr.mxu0 0.0
    %387 = vmatpush1.msra.mxu0 0.0
    %388 = vmatprep.subr.mxu0 0.0
    %389 = vmatpush1.msra.mxu0 0.0
    %390 = vmatprep.subr.mxu0 0.0
    %391 = vmatpush1.msra.mxu0 0.0
    %392 = vmatprep.subr.mxu0 0.0
    %393 = vmatpush1.msra.mxu0 0.0
    %394 = vmatprep.subr.mxu0 0.0
    %395 = vmatpush1.msra.mxu0 0.0
    %396 = vmatprep.subr.mxu0 0.0
    %397 = vmatpush1.msra.mxu0 0.0
    %398 = vmatprep.mubr.f32.mxu0 0.0
    %399 = vmatmul.mubr.f32.gmra.mrb[0].mxu0 %v323
    %v400 = vpop.f32.mrb[0].mxu0
    %v401 = vadd.f32 %v305, %v400
    %v402 = vpop.f32.mrb[0].mxu0
    %403 = vmatprep.mubr.f32.mxu0 0.0
    %404 = vmatmul.mubr.f32.gmra.mrb[0].mxu0 %v326
    %v405 = vpop.f32.mrb[0].mxu0
    %v406 = vadd.f32 %v310, %v405
    %v407 = vpop.f32.mrb[0].mxu0
    %408 = vmatprep.mubr.f32.mxu0 0.0
    %409 = vmatmul.mubr.f32.gmra.mrb[0].mxu0 %v329
    %v410 = vpop.f32.mrb[0].mxu0
    %v411 = vadd.f32 %v315, %v410
    %v412 = vpop.f32.mrb[0].mxu0
    %413 = vmatprep.mubr.f32.mxu0 0.0
    %414 = vmatmul.mubr.f32.gmra.mrb[0].mxu0 %v332
    %v415 = vpop.f32.mrb[0].mxu0
    %v416 = vadd.f32 %v320, %v415
    %v417 = vpop.f32.mrb[0].mxu0
    %418 = vdwg.mxu0
    %v419 = vtanh.pop %v401
    %v420 = vtanh.pop %v406
    %v421 = vtanh.pop %v411
    %v422 = vtanh.pop %v416
    %v423 = vld [vmem:[%s5] sm:$0xff]
    %v424 = vld [vmem:[%s5 + $0x8] sm:$0xff]
    %v425 = vld [vmem:[%s5 + $0x10] sm:$0xff]
    %v426 = vld [vmem:[%s6] sm:$0xff]
    %v427 = vld [vmem:[%s6 + $0x8] sm:$0xff]
    %v428 = vld [vmem:[%s6 + $0x10] sm:$0xff]
    %430 = vset.pattern.permute.xlu0 0
    %431 = vperm.xlu0 %430, %v426
    %v432 = vpop.permute.xlu0 %431
    %435 = vset.pattern.permute.xlu0 0
    %436 = vperm.xlu0 %435, %v427
    %v437 = vpop.permute.xlu0 %436
    %440 = vset.pattern.permute.xlu0 0
    %441 = vperm.xlu0 %440, %v428
    %v442 = vpop.permute.xlu0 %441
    %v445 = vsel %vm190, %v423, 0
    %v448 = vsel %vm190, %v424, 0
    %v451 = vsel %vm190, %v425, 0
    %453 = vmatprep.subr.mxu0 0.0
    %454 = vmatpush1.msra.mxu0 %v419
    %455 = vmatprep.subr.mxu0 0.0
    %456 = vmatpush1.msra.mxu0 %v420
    %457 = vmatprep.subr.mxu0 0.0
    %458 = vmatpush1.msra.mxu0 %v421
    %459 = vmatprep.subr.mxu0 0.0
    %460 = vmatpush1.msra.mxu0 %v422
    %461 = vmatprep.subr.mxu0 0.0
    %462 = vmatpush1.msra.mxu0 0.0
    %463 = vmatprep.subr.mxu0 0.0
    %464 = vmatpush1.msra.mxu0 0.0
    %465 = vmatprep.subr.mxu0 0.0
    %466 = vmatpush1.msra.mxu0 0.0
    %467 = vmatprep.subr.mxu0 0.0
    %468 = vmatpush1.msra.mxu0 0.0
    %469 = vmatprep.subr.mxu0 0.0
    %470 = vmatpush1.msra.mxu0 0.0
    %471 = vmatprep.subr.mxu0 0.0
    %472 = vmatpush1.msra.mxu0 0.0
    %473 = vmatprep.subr.mxu0 0.0
    %474 = vmatpush1.msra.mxu0 0.0
    %475 = vmatprep.subr.mxu0 0.0
    %476 = vmatpush1.msra.mxu0 0.0
    %477 = vmatprep.subr.mxu0 0.0
    %478 = vmatpush1.msra.mxu0 0.0
    %479 = vmatprep.subr.mxu0 0.0
    %480 = vmatpush1.msra.mxu0 0.0
    %481 = vmatprep.subr.mxu0 0.0
    %482 = vmatpush1.msra.mxu0 0.0
    %483 = vmatprep.subr.mxu0 0.0
    %484 = vmatpush1.msra.mxu0 0.0
    %485 = vmatprep.subr.mxu0 0.0
    %486 = vmatpush1.msra.mxu0 0.0
    %487 = vmatprep.subr.mxu0 0.0
    %488 = vmatpush1.msra.mxu0 0.0
    %489 = vmatprep.subr.mxu0 0.0
    %490 = vmatpush1.msra.mxu0 0.0
    %491 = vmatprep.subr.mxu0 0.0
    %492 = vmatpush1.msra.mxu0 0.0
    %493 = vmatprep.subr.mxu0 0.0
    %494 = vmatpush1.msra.mxu0 0.0
    %495 = vmatprep.subr.mxu0 0.0
    %496 = vmatpush1.msra.mxu0 0.0
    %497 = vmatprep.subr.mxu0 0.0
    %498 = vmatpush1.msra.mxu0 0.0
    %499 = vmatprep.subr.mxu0 0.0
    %500 = vmatpush1.msra.mxu0 0.0
    %501 = vmatprep.subr.mxu0 0.0
    %502 = vmatpush1.msra.mxu0 0.0
    %503 = vmatprep.subr.mxu0 0.0
    %504 = vmatpush1.msra.mxu0 0.0
    %505 = vmatprep.subr.mxu0 0.0
    %506 = vmatpush1.msra.mxu0 0.0
    %507 = vmatprep.subr.mxu0 0.0
    %508 = vmatpush1.msra.mxu0 0.0
    %509 = vmatprep.subr.mxu0 0.0
    %510 = vmatpush1.msra.mxu0 0.0
    %511 = vmatprep.subr.mxu0 0.0
    %512 = vmatpush1.msra.mxu0 0.0
    %513 = vmatprep.subr.mxu0 0.0
    %514 = vmatpush1.msra.mxu0 0.0
    %515 = vmatprep.subr.mxu0 0.0
    %516 = vmatpush1.msra.mxu0 0.0
    %517 = vmatprep.mubr.f32.mxu0 0.0
    %518 = vmatmul.mubr.f32.gmra.mrb[0].mxu0 %v445
    %v519 = vpop.f32.mrb[0].mxu0
    %v520 = vadd.f32 %v432, %v519
    %v521 = vpop.f32.mrb[0].mxu0
    %522 = vmatprep.mubr.f32.mxu0 0.0
    %523 = vmatmul.mubr.f32.gmra.mrb[0].mxu0 %v448
    %v524 = vpop.f32.mrb[0].mxu0
    %v525 = vadd.f32 %v437, %v524
    %v526 = vpop.f32.mrb[0].mxu0
    %527 = vmatprep.mubr.f32.mxu0 0.0
    %528 = vmatmul.mubr.f32.gmra.mrb[0].mxu0 %v451
    %v529 = vpop.f32.mrb[0].mxu0
    %v530 = vadd.f32 %v442, %v529
    %v531 = vpop.f32.mrb[0].mxu0
    %532 = vdwg.mxu0
    %vm533 = vcmask 523264
    %v534 = vsel %vm533, %v520, -inf
    %v535 = vrot.slane %v534, 4
    %v536 = vmax.f32 %v534, %v535
    %v537 = vrot.slane %v536, 2
    %v538 = vmax.f32 %v536, %v537
    %v539 = vrot.slane %v538, 1
    %v540 = vmax.f32 %v538, %v539
    %v541 = vsub.f32 %v520, %v540
    %v542 = vmul.f32 %v541, 1.442695
    %v543 = vpow.pop %v542
    %v544 = vsel %vm533, %v543, 0.0
    %v545 = vrot.slane %v544, 4
    %v546 = vadd.f32 %v544, %v545
    %v547 = vrot.slane %v546, 2
    %v548 = vadd.f32 %v546, %v547
    %v549 = vrot.slane %v548, 1
    %v550 = vadd.f32 %v548, %v549
    %v551 = vrcp.pop %v550
    %v552 = vmul.f32 %v550, %v551
    %v553 = vsub.f32 2.0, %v552
    %v554 = vmul.f32 %v551, %v553
    %v555 = vmul.f32 %v543, %v554
    %556 = vst.msk [vmem:[#allocation2] sm:$0xff] %vm533, %v555
    %v557 = vmul.f32 %v525, 1.442695
    %v558 = vpow.pop %v557
    %559 = vst.msk [vmem:[#allocation2 + $0x8] sm:$0xff] %vm533, %v558
    %560 = vst.msk [vmem:[#allocation2 + $0x10] sm:$0xff] %vm533, %v530
    // Predicated region
    $region30: #{tpu_custom_call.1} parent=1 // pred_check
      _
    $region31: #{tpu_custom_call.1} parent=1 // pred_check_branch
      %562 = sbr.rel (0) target = $region33
    $region32: #{tpu_custom_call.1} parent=1 // pred_region
      %s564 = ssub.s32 384, 384
      %565 = vsyncadd [#allocation3], %s564
      %s566 = sshll.u32 [#allocation2], 4
      %s567 = int_to_ptr.vmem [resolvable:$true] %s566
      %572 = dma.vmem_to_hbm [thread:$0]  %s567, 384, %s7, [#allocation3], 128, 128, 8
    $region33: #{tpu_custom_call.1} parent=1 // pred_fallthru
      _
    // Predicated region
    $region34: #{tpu_custom_call.1} parent=1 // pred_check
      _
    $region35: #{tpu_custom_call.1} parent=1 // pred_check_branch
      %574 = sbr.rel (0) target = $region37
    $region36: #{tpu_custom_call.1} parent=1 // pred_region
      %575 = dma.done [#allocation3], 384
    $region37: #{tpu_custom_call.1} parent=1 // pred_fallthru
      _
    %576 = vsyncpa [#allocation3], 1

</llo_original>
